<compile_context>
chip_gen: v5e
topology: v5e:2x2
jax: 0.10.0
libtpu: 0.0.40
codegen_flags: <defaults>
</compile_context>

<pallas_src>
import functools

import jax
import jax.numpy as jnp
from jax import lax
from jax.experimental import pallas as pl
from jax.experimental.pallas import tpu as pltpu

BIT_WIDTH_WEIGHT = 4
BN_EPS = 1e-5

# VMEM sizing: keep double-buffered (input + output) spatial tiles well under
# the scoped-VMEM ceiling of the smallest generation (v7x: 32 MiB scoped of
# 64 MiB physical per TC; v5e/v6e have 128 MiB physical).
_TILE_VMEM_BUDGET = 12 * 1024 * 1024
_VMEM_LIMIT = 32 * 1024 * 1024


def fake_quant_weight(w, bit_width=BIT_WIDTH_WEIGHT):
    """Symmetric per-tensor int<bit_width> fake-quant of conv weights.
    # TODO(synk): approximates Brevitas' default QuantConv2d weight quantizer
    # (narrow-range symmetric per-tensor scale); the exact stats-based learned
    # scale has no clean in-script equivalent.
    """
    qmax = 2.0 ** (bit_width - 1) - 1.0
    scale = jnp.max(jnp.abs(w)) / qmax
    scale = jnp.where(scale == 0.0, 1.0, scale)
    q = jnp.clip(jnp.round(w / scale), -qmax, qmax)
    return (q * scale).astype(jnp.float32)


# --------------------------------------------------------------------------
# Pass 1: per-image input statistics, accumulated over spatial tiles.
#   x_ref   : (1, 2C, Ts)       bf16/f32 tile of the gathered/concatenated input
#   stat_ref: (1, 2C, 2C+1) f32 resident across the sb axis:
#             [:, :, :2C] = sum_s x_s x_s^T (Gram), [:, :, 2C] = sum_s x_s
# --------------------------------------------------------------------------
def _stats_kernel(x_ref, stat_ref):
    sb = pl.program_id(1)

    @pl.when(sb == 0)
    def _init():
        stat_ref[...] = jnp.zeros_like(stat_ref)

    x = x_ref[0]                                                 # (2C, Ts)
    gram = jnp.einsum("ct,dt->cd", x, x,
                      preferred_element_type=jnp.float32)        # (2C, 2C) MXU
    sx = jnp.sum(x.astype(jnp.float32), axis=1, keepdims=True)   # (2C, 1)  XLU
    stat_ref[0] += jnp.concatenate([gram, sx], axis=1)


# --------------------------------------------------------------------------
# Pass 2: fused block-diagonal conv matmul with BN scale folded into weights.
#   x_ref    : (1, 2C, Ts)
#   w_ref    : (Co, 2C)   = diag(gamma/std) @ W_bd
#   shift_ref: (Co, 1)    = beta - mean * gamma / std
#   out_ref  : (1, Co, Ts)  lane-dense output tile (NCHW, spatial flattened)
# --------------------------------------------------------------------------
def _conv_bn_kernel(x_ref, w_ref, shift_ref, out_ref):
    y = jnp.dot(w_ref[...], x_ref[0],
                preferred_element_type=jnp.float32)              # (Co, Ts) MXU
    out_ref[0] = (y + shift_ref[...]).astype(out_ref.dtype)


def _pick_spatial_tile(Sp, k_rows, out_rows, in_bytes, out_bytes,
                       budget=_TILE_VMEM_BUDGET):
    """Largest multiple-of-128 tile of the (padded) spatial axis whose
    double-buffered input + output tiles fit the VMEM byte budget and which
    divides Sp exactly (Sp is already a multiple of 128)."""
    per_lane = 2 * (k_rows * in_bytes + out_rows * out_bytes)  # 2x: double-buffer
    max_ts = max(128, ((budget // per_lane) // 128) * 128)
    ts = min(Sp, max_ts)
    ts = max(128, (ts // 128) * 128)
    while Sp % ts != 0:
        ts -= 128
    return ts


@functools.partial(jax.jit, static_argnames=("use_bf16_inputs",))
def factorized_forward(x_nchw, w1, w2, gamma, beta, use_bf16_inputs=True):
    """x_nchw: (N, Cin, H, W) f32.  w1, w2: (Cin, Cout//2).  Returns NCHW f32."""
    N, C, H, W = x_nchw.shape
    assert H % 2 == 0 and W % 2 == 0, "Factorized reduce assumes even H and W"
    Co2 = w1.shape[1]
    Co = 2 * Co2
    Ho, Wo = H // 2, W // 2
    S = Ho * Wo                      # flattened output spatial extent per image
    K = 2 * C                        # contraction dim of the fused matmul

    # Stride-2 even/even + odd/odd gathers, fused into one channel concat, all
    # in NCHW (no NHWC transpose, no output transpose).
    # TODO(synk): eliminate the materialized xcat (allow_input_fusion or an
    # in-kernel pl.ds(..., stride=2) gather) to cut another ~25-35% HBM traffic.
    x1 = x_nchw[:, :, 0::2, 0::2]                     # conv_1 samples (even/even)
    x2 = x_nchw[:, :, 1::2, 1::2]                     # conv_2 on x[:, :, 1:, 1:]
    in_dtype = jnp.bfloat16 if use_bf16_inputs else jnp.float32
    xcat = jnp.concatenate([x1, x2], axis=1).reshape(N, K, S).astype(in_dtype)

    # Zero-pad the flattened spatial axis to a multiple of 128 -> lane-dense
    # tiles and unmasked stores.  Padded zeros contribute nothing to the Gram /
    # sum statistics (we divide by the true count N*S) and the padded output
    # columns are sliced off.
    # TODO(synk): for S < 128 a batch-into-lanes packing (2C, N*S) would avoid
    # the padded lanes entirely at the cost of one output transpose.
    Sp = ((S + 127) // 128) * 128
    if Sp != S:
        xcat = jnp.pad(xcat, ((0, 0), (0, 0), (0, Sp - S)))

    # 4-bit fake-quantized weights, merged into one block-diagonal matrix so the
    # two convs + channel concat become a single K=2*Cin MXU matmul.
    # TODO(synk): on v5e/v6e an int8-activation x int4-weight MXU path would cut
    # activation bytes 2x further (not available on v7x's fp8-only MXU).
    w1q = fake_quant_weight(w1)                       # (Cin, Co/2)
    w2q = fake_quant_weight(w2)
    wbd = jnp.zeros((Co, K), jnp.float32)
    wbd = wbd.at[:Co2, :C].set(w1q.T)
    wbd = wbd.at[Co2:, C:].set(w2q.T)

    in_bytes = jnp.dtype(in_dtype).itemsize
    Ts = _pick_spatial_tile(Sp, K, Co, in_bytes, 4)
    SB = Sp // Ts
    grid = (N, SB)

    x_spec = pl.BlockSpec((1, K, Ts), lambda n, sb: (n, 0, sb))

    # ---- Pass 1: per-image input Gram statistics (Cout-independent) ---------
    stats = pl.pallas_call(
        _stats_kernel,
        out_shape=jax.ShapeDtypeStruct((N, K, K + 1), jnp.float32),
        grid=grid,
        in_specs=[x_spec],
        out_specs=pl.BlockSpec((1, K, K + 1), lambda n, sb: (n, 0, 0)),
        compiler_params=pltpu.CompilerParams(
            dimension_semantics=("parallel", "arbitrary"),
            vmem_limit_bytes=_VMEM_LIMIT,
        ),
    )(xcat)

    # Combine in plain JAX (tiny), derive BN stats of y = W_bd @ x and fold the
    # affine into weight / shift:
    #   mean = W sx / m ;  E[y^2] = diag(W G W^T) / m ;  var = E[y^2] - mean^2
    gram = jnp.sum(stats[:, :, :K], axis=0)                        # (K, K)
    sx = jnp.sum(stats[:, :, K], axis=0)                           # (K,)
    m_tot = jnp.float32(N * S)
    wq = wbd.astype(in_dtype).astype(jnp.float32)                  # pass-2 rounding
    mean = (wq @ sx) / m_tot                                       # (Co,)
    ey2 = jnp.sum((wq @ gram) * wq, axis=1) / m_tot                # (Co,)
    var = jnp.maximum(ey2 - mean * mean, 0.0)                      # biased var
    # TODO(synk): single-pass E[y^2]-E[y]^2 can cancel when |mean| >> std; a
    # centered / Welford-style combine would be needed if that regime matters.
    inv_std = lax.rsqrt(var + BN_EPS)
    scale = gamma.astype(jnp.float32) * inv_std                    # (Co,)
    shift = (beta.astype(jnp.float32) - mean * scale).reshape(Co, 1)
    w_scaled = (wbd * scale[:, None]).astype(in_dtype)

    # ---- Pass 2: conv recompute with folded BN scale + shift ----------------
    out = pl.pallas_call(
        _conv_bn_kernel,
        out_shape=jax.ShapeDtypeStruct((N, Co, Sp), jnp.float32),
        grid=grid,
        in_specs=[
            x_spec,
            pl.BlockSpec((Co, K), lambda n, sb: (0, 0)),
            pl.BlockSpec((Co, 1), lambda n, sb: (0, 0)),
        ],
        out_specs=pl.BlockSpec((1, Co, Ts), lambda n, sb: (n, 0, sb)),
        compiler_params=pltpu.CompilerParams(
            dimension_semantics=("parallel", "parallel"),
            vmem_limit_bytes=_VMEM_LIMIT,
        ),
    )(xcat, w_scaled, shift)

    # Output already NCHW with (padded) flattened spatial — slice + un-flatten.
    return out[:, :, :S].reshape(N, Co, Ho, Wo)


def _reference(x, w1, w2, gamma, beta):
    """Pure-JAX f32 reference of the same forward (numerical self-check)."""
    w1q, w2q = fake_quant_weight(w1), fake_quant_weight(w2)
    x1 = x[:, :, 0::2, 0::2]
    x2 = x[:, :, 1::2, 1::2]
    y1 = jnp.einsum("nchw,co->nohw", x1, w1q, precision="highest")
    y2 = jnp.einsum("nchw,co->nohw", x2, w2q, precision="highest")
    y = jnp.concatenate([y1, y2], axis=1)
    mean = y.mean(axis=(0, 2, 3), keepdims=True)
    var = y.var(axis=(0, 2, 3), keepdims=True)        # biased, training-mode BN
    y_hat = (y - mean) * lax.rsqrt(var + BN_EPS)
    return y_hat * gamma.reshape(1, -1, 1, 1) + beta.reshape(1, -1, 1, 1)


if __name__ == "__main__":
    key = jax.random.PRNGKey(0)
    k1, k2, kx = jax.random.split(key, 3)

    in_channels, out_channels = 4, 8
    N, H, W = 2, 16, 16

    x = jax.random.normal(kx, (N, in_channels, H, W), dtype=jnp.float32)
    # Conv weights (PyTorch (Cout/2, Cin, 1, 1) stored here as (Cin, Cout/2)).
    w1 = 0.1 * jax.random.normal(k1, (in_channels, out_channels // 2), dtype=jnp.float32)
    w2 = 0.1 * jax.random.normal(k2, (in_channels, out_channels // 2), dtype=jnp.float32)
    # BatchNorm2d default affine init.
    gamma = jnp.ones((out_channels,), dtype=jnp.float32)
    beta = jnp.zeros((out_channels,), dtype=jnp.float32)

    out = factorized_forward(x, w1, w2, gamma, beta)
    jax.block_until_ready(out)

    assert out.shape == (N, out_channels, H // 2, W // 2), out.shape
    assert out.dtype == jnp.float32

    ref = _reference(x, w1, w2, gamma, beta)
    max_err = float(jnp.max(jnp.abs(out - ref)))
    # Default path uses bf16 activations/weights (f32 accumulate); tolerance is
    # sized for bf16 rounding relative to the unit-variance BN output.
    assert max_err < 3e-2, f"mismatch vs reference: {max_err}"

    print("KERNEL_OK")
</pallas_src>

<mosaic_0001>
module attributes {stable_mosaic.version = 11 : i64} {
  func.func @_stats_kernel(%arg0: i32, %arg1: i32, %arg2: memref<1x8x128xbf16, #tpu.memory_space<vmem>>, %arg3: memref<1x8x9xf32, #tpu.memory_space<vmem>>) attributes {dimension_semantics = [#tpu.dimension_semantics<parallel>, #tpu.dimension_semantics<arbitrary>], iteration_bounds = array<i64: 2, 1>, scalar_prefetch = 0 : i64, scratch_operands = 0 : i64, tpu.core_type = #tpu.core_type<tc>, window_params = [{transform_indices = @transform_0, window_bounds = array<i64: 1, 8, 128>}, {transform_indices = @transform_1, window_bounds = array<i64: 1, 8, 9>}]} {
    %c0_i32 = arith.constant 0 : i32
    %0 = arith.cmpi eq, %arg1, %c0_i32 : i32
    %1 = arith.extui %0 : i1 to i32
    %c0_i32_0 = arith.constant 0 : i32
    %2 = arith.cmpi ne, %1, %c0_i32_0 : i32
    scf.if %2 {
      %cst_10 = arith.constant 0.000000e+00 : f32
      %16 = vector.broadcast %cst_10 : f32 to vector<1x8x9xf32>
      %c0_11 = arith.constant 0 : index
      %c0_12 = arith.constant 0 : index
      %c0_13 = arith.constant 0 : index
      %17 = vector.load %arg3[%c0_11, %c0_12, %c0_13] : memref<1x8x9xf32, #tpu.memory_space<vmem>>, vector<1x8x9xf32>
      tpu.vector_store %arg3[%c0_11, %c0_12, %c0_13], %16 {strides = array<i32>} : memref<1x8x9xf32, #tpu.memory_space<vmem>>, vector<1x8x9xf32>,
    } else {
    }
    %c0 = arith.constant 0 : index
    %c0_1 = arith.constant 0 : index
    %c0_2 = arith.constant 0 : index
    %3 = vector.load %arg2[%c0, %c0_1, %c0_2] : memref<1x8x128xbf16, #tpu.memory_space<vmem>>, vector<1x8x128xbf16>
    %4 = vector.shape_cast %3 : vector<1x8x128xbf16> to vector<8x128xbf16>
    "tpu.trace_start"() <{level = 10 : i32, message = "ct,dt->cd"}> : () -> ()
    %cst = arith.constant dense<0.000000e+00> : vector<8x8xf32>
    %5 = tpu.matmul %4, %4, %cst {dimension_numbers = #tpu.dot_dimension_numbers<[1], [1], [0], [0], [0, 0, 1, 0], [], []>} : vector<8x128xbf16>, vector<8x128xbf16>, vector<8x8xf32> -> vector<8x8xf32>
    "tpu.trace_stop"() : () -> ()
    %6 = arith.extf %4 : vector<8x128xbf16> to vector<8x128xf32>
    %cst_3 = arith.constant dense<0.000000e+00> : vector<8xf32>
    %7 = vector.multi_reduction <add>, %6, %cst_3 [1] : vector<8x128xf32> to vector<8xf32>
    %8 = vector.shape_cast %7 : vector<8xf32> to vector<8x1xf32>
    %c0_4 = arith.constant 0 : index
    %c0_5 = arith.constant 0 : index
    %c0_6 = arith.constant 0 : index
    %9 = vector.load %arg3[%c0_4, %c0_5, %c0_6] : memref<1x8x9xf32, #tpu.memory_space<vmem>>, vector<1x8x9xf32>
    %10 = vector.shape_cast %9 : vector<1x8x9xf32> to vector<8x9xf32>
    %11 = tpu.concatenate %5, %8 in 1 : vector<8x8xf32>, vector<8x1xf32> -> vector<8x9xf32>
    %12 = arith.addf %10, %11 : vector<8x9xf32>
    %c0_7 = arith.constant 0 : index
    %c0_8 = arith.constant 0 : index
    %c0_9 = arith.constant 0 : index
    %13 = vector.load %arg3[%c0_7, %c0_8, %c0_9] : memref<1x8x9xf32, #tpu.memory_space<vmem>>, vector<1x8x9xf32>
    %14 = vector.shape_cast %13 : vector<1x8x9xf32> to vector<8x9xf32>
    %15 = vector.shape_cast %12 : vector<8x9xf32> to vector<1x8x9xf32>
    tpu.vector_store %arg3[%c0_7, %c0_8, %c0_9], %15 {strides = array<i32>} : memref<1x8x9xf32, #tpu.memory_space<vmem>>, vector<1x8x9xf32>,
    return
  }
  func.func @transform_0(%arg0: i32, %arg1: i32) -> (i32, i32, i32) {
    %c0_i32 = arith.constant 0 : i32
    %c0_i32_0 = arith.constant 0 : i32
    return %arg0, %c0_i32, %arg1 : i32, i32, i32
  }
  func.func @transform_1(%arg0: i32, %arg1: i32) -> (i32, i32, i32) {
    %c0_i32 = arith.constant 0 : i32
    %c0_i32_0 = arith.constant 0 : i32
    %c0_i32_1 = arith.constant 0 : i32
    return %arg0, %c0_i32, %c0_i32_0 : i32, i32, i32
  }
}

module attributes {stable_mosaic.version = 11 : i64} {
  func.func @_conv_bn_kernel(%arg0: i32, %arg1: i32, %arg2: memref<1x8x128xbf16, #tpu.memory_space<vmem>>, %arg3: memref<8x8xbf16, #tpu.memory_space<vmem>>, %arg4: memref<8x1xf32, #tpu.memory_space<vmem>>, %arg5: memref<1x8x128xf32, #tpu.memory_space<vmem>>) attributes {dimension_semantics = [#tpu.dimension_semantics<parallel>, #tpu.dimension_semantics<parallel>], iteration_bounds = array<i64: 2, 1>, scalar_prefetch = 0 : i64, scratch_operands = 0 : i64, tpu.core_type = #tpu.core_type<tc>, window_params = [{transform_indices = @transform_0, window_bounds = array<i64: 1, 8, 128>}, {pipeline_mode = #tpu.pipeline_mode<synchronous>, transform_indices = @transform_1, window_bounds = array<i64: 8, 8>}, {pipeline_mode = #tpu.pipeline_mode<synchronous>, transform_indices = @transform_2, window_bounds = array<i64: 8, 1>}, {transform_indices = @transform_3, window_bounds = array<i64: 1, 8, 128>}]} {
    %c0 = arith.constant 0 : index
    %c0_0 = arith.constant 0 : index
    %0 = vector.load %arg3[%c0, %c0_0] : memref<8x8xbf16, #tpu.memory_space<vmem>>, vector<8x8xbf16>
    %c0_1 = arith.constant 0 : index
    %c0_2 = arith.constant 0 : index
    %c0_3 = arith.constant 0 : index
    %1 = vector.load %arg2[%c0_1, %c0_2, %c0_3] : memref<1x8x128xbf16, #tpu.memory_space<vmem>>, vector<1x8x128xbf16>
    %2 = vector.shape_cast %1 : vector<1x8x128xbf16> to vector<8x128xbf16>
    %cst = arith.constant dense<0.000000e+00> : vector<8x128xf32>
    %3 = tpu.matmul %0, %2, %cst {dimension_numbers = #tpu.dot_dimension_numbers<[1], [0], [0], [1], [0, 0, 1, 1], [], []>} : vector<8x8xbf16>, vector<8x128xbf16>, vector<8x128xf32> -> vector<8x128xf32>
    %c0_4 = arith.constant 0 : index
    %c0_5 = arith.constant 0 : index
    %4 = vector.load %arg4[%c0_4, %c0_5] : memref<8x1xf32, #tpu.memory_space<vmem>>, vector<8x1xf32>
    %5 = vector.broadcast %4 : vector<8x1xf32> to vector<8x128xf32>
    %6 = arith.addf %3, %5 : vector<8x128xf32>
    %c0_6 = arith.constant 0 : index
    %c0_7 = arith.constant 0 : index
    %c0_8 = arith.constant 0 : index
    %7 = vector.load %arg5[%c0_6, %c0_7, %c0_8] : memref<1x8x128xf32, #tpu.memory_space<vmem>>, vector<1x8x128xf32>
    %8 = vector.shape_cast %7 : vector<1x8x128xf32> to vector<8x128xf32>
    %9 = vector.shape_cast %6 : vector<8x128xf32> to vector<1x8x128xf32>
    tpu.vector_store %arg5[%c0_6, %c0_7, %c0_8], %9 {strides = array<i32>} : memref<1x8x128xf32, #tpu.memory_space<vmem>>, vector<1x8x128xf32>,
    return
  }
  func.func @transform_0(%arg0: i32, %arg1: i32) -> (i32, i32, i32) {
    %c0_i32 = arith.constant 0 : i32
    %c0_i32_0 = arith.constant 0 : i32
    return %arg0, %c0_i32, %arg1 : i32, i32, i32
  }
  func.func @transform_1(%arg0: i32, %arg1: i32) -> (i32, i32) {
    %c0_i32 = arith.constant 0 : i32
    %c0_i32_0 = arith.constant 0 : i32
    %c0_i32_1 = arith.constant 0 : i32
    return %c0_i32, %c0_i32_0 : i32, i32
  }
  func.func @transform_2(%arg0: i32, %arg1: i32) -> (i32, i32) {
    %c0_i32 = arith.constant 0 : i32
    %c0_i32_0 = arith.constant 0 : i32
    %c0_i32_1 = arith.constant 0 : i32
    return %c0_i32, %c0_i32_0 : i32, i32
  }
  func.func @transform_3(%arg0: i32, %arg1: i32) -> (i32, i32, i32) {
    %c0_i32 = arith.constant 0 : i32
    %c0_i32_0 = arith.constant 0 : i32
    return %arg0, %c0_i32, %arg1 : i32, i32, i32
  }
}

</mosaic_0001>

<llo_original>
// kernel: factorized_forward.2
$region0: #{factorized_forward.2}
  #allocation0 [shape = 'u32[]', space=smem, size = 0x4, offset = 0x4, fixed_abs, tag = 'smem constant byte address 0x4 - core index']
  #allocation1 [shape = 'u32[72,128]{1,0:T(1,128)}', space=vmem, size = 0x9000, scoped, tag = 'internal scratch']
  %s0 = inlined_call_operand.vmem [shape: bf16[2,8,128], index: 0, kind: input, shape index: {}]
  %s1 = inlined_call_operand.vmem [shape: f32[2,8,9], index: 1, kind: output, shape index: {}]
  %s2 = sld [smem:[#allocation0]]
  $region41: #{factorized_forward.2} parent=0
    _
  %s4 = ssub.s32 1, %s2
  %s5 = scalar_select 0, %s4, %s2
  loop: start=0, step=1, limit=4
  $region2: #{factorized_forward.2} parent=0 // loop_pre_header
    _
  $region3: #{factorized_forward.2} parent=0 // loop_header
    %s7 = sphi 0, %s11
    %p8 = scmp.ge.s32.totalorder %s7, 4
    %s14 = sphi 0, %s26
    %s15 = sphi 0, %s22
    %s16 = sphi 0, %s14
    %s17 = sphi 0, %s15
    %s18 = sphi 0, %s16
    %s19 = sphi 0, %s17
    %s31 = sphi 0, %s33
    %s34 = sphi 0, %s31
    %s35 = sphi 0, %s34
    %s51 = sphi 0, %s35
    %s57 = sphi 0, %s59
    %s60 = sphi 0, %s57
    %s61 = sphi 0, %s60
    %s77 = sphi 0, %s61
  $region4: #{factorized_forward.2} parent=0 // loop_header_branch
    %10 = sbr.rel (%p8) target = $region8
  $region5: #{factorized_forward.2} parent=0 // loop_body
    %s12 = ssub.s32 %s7, 1
    %s13 = ssub.s32 %s7, 2
    %s20 = sadd.s32 1, %s15
    %p21 = scmp.ge.s32.totalorder %s20, 1
    %s22 = scalar_select %p21, 0, %s20
    %s23 = sadd.s32 1, %s14
    %s24 = scalar_select %p21, %s23, %s14
    %p25 = scmp.ge.s32.totalorder %s24, 2
    %s26 = scalar_select %p25, 0, %s24
    %s27 = ssub.s32 %s14, %s26
    %s28 = ssub.s32 %s15, %s22
    %s29 = sor.u32 %s27, %s28
    %p30 = scmp.eq.s32.totalorder %s29, 0
    %s32 = sadd.s32 %s31, 1
    %s33 = scalar_select %p30, %s31, %s32
    %p36 = pneg %p30
    %p37 = scmp.eq.s32.totalorder %s7, 1
    %p38 = por %p36, %p37
    %p39 = scmp.ne.s32.totalorder %s31, %s34
    %p40 = scmp.eq.s32.totalorder %s7, 0
    %p41 = por %p39, %p40
    %p42 = scmp.ne.s32.totalorder %s31, %s34
    %p43 = scmp.eq.s32.totalorder %s12, 1
    %p44 = por %p42, %p43
    %p45 = scmp.ne.s32.totalorder %s34, %s35
    %p46 = scmp.eq.s32.totalorder %s12, 0
    %p47 = por %p45, %p46
    %p48 = scmp.ne.s32.totalorder %s34, %s35
    %p49 = scmp.eq.s32.totalorder %s13, 1
    %p50 = por %p48, %p49
    %p52 = scmp.ne.s32.totalorder %s35, %s51
    %p53 = scmp.eq.s32.totalorder %s13, 0
    %p54 = por %p52, %p53
    %s55 = ssub.s32 %s14, %s26
    %p56 = scmp.eq.s32.totalorder %s55, 0
    %s58 = sadd.s32 %s57, 1
    %s59 = scalar_select %p56, %s57, %s58
    %p62 = pneg %p56
    %p63 = scmp.eq.s32.totalorder %s7, 1
    %p64 = por %p62, %p63
    %p65 = scmp.ne.s32.totalorder %s57, %s60
    %p66 = scmp.eq.s32.totalorder %s7, 0
    %p67 = por %p65, %p66
    %p68 = scmp.ne.s32.totalorder %s57, %s60
    %p69 = scmp.eq.s32.totalorder %s12, 1
    %p70 = por %p68, %p69
    %p71 = scmp.ne.s32.totalorder %s60, %s61
    %p72 = scmp.eq.s32.totalorder %s12, 0
    %p73 = por %p71, %p72
    %p74 = scmp.ne.s32.totalorder %s60, %s61
    %p75 = scmp.eq.s32.totalorder %s13, 1
    %p76 = por %p74, %p75
    %p78 = scmp.ne.s32.totalorder %s61, %s77
    %p79 = scmp.eq.s32.totalorder %s13, 0
    %p80 = por %p78, %p79
    %p81 = scmp.le.s32.totalorder 1, %s7
    %p82 = scmp.lt.s32.totalorder %s7, 3
    %p83 = pnand %p81, %p82
    %p84 = pneg %p83
    // Predicated region
    $region9: #{factorized_forward.2} parent=5 // pred_check
      _
    $region10: #{factorized_forward.2} parent=5 // pred_check_branch
      %86 = sbr.rel (%p83) target = $region12
    $region11: #{factorized_forward.2} parent=5 // pred_region
      %s87 = ssub.s32 %s7, 1
    $region12: #{factorized_forward.2} parent=5 // pred_fallthru
      _
    %p88 = scmp.lt.s32.totalorder %s7, 2
    // Predicated region
    $region13: #{factorized_forward.2} parent=5 // pred_check
      %p89 = pneg %p88
    $region14: #{factorized_forward.2} parent=5 // pred_check_branch
      %91 = sbr.rel (%p89) target = $region16
    $region15: #{factorized_forward.2} parent=5 // pred_region
      // Predicated region
      $region17: #{factorized_forward.2} parent=15 // pred_check
        %p92 = pneg %p41
      $region18: #{factorized_forward.2} parent=15 // pred_check_branch
        %94 = sbr.rel (%p92) target = $region20
      $region19: #{factorized_forward.2} parent=15 // pred_region
        %p95 = scmp.lt.s32.totalorder %s14, 1
        %s96 = scalar_select %p95, %s14, 1
        %p97 = scmp.lt.s32.totalorder %s15, 0
        %s98 = scalar_select %p97, %s15, 0
        %s99 = sadd.s32 %s98, %s96
        %s100 = smul.addr %s99, 4
        %s101 = scalar_lea.vmem %s0, %s100
      $region20: #{factorized_forward.2} parent=15 // pred_fallthru
        _
    $region16: #{factorized_forward.2} parent=5 // pred_fallthru
      _
    %p102 = scmp.le.s32.totalorder 1, %s7
    %p103 = scmp.lt.s32.totalorder %s7, 3
    %p104 = pnand %p102, %p103
    %p105 = pneg %p104
    // Predicated region
    $region21: #{factorized_forward.2} parent=5 // pred_check
      _
    $region22: #{factorized_forward.2} parent=5 // pred_check_branch
      %107 = sbr.rel (%p104) target = $region24
    $region23: #{factorized_forward.2} parent=5 // pred_region
      %s108 = ssub.s32 %s7, 1
      %p109 = scmp.lt.s32.totalorder %s16, 1
      %s110 = scalar_select %p109, %s16, 1
      %p111 = scmp.lt.s32.totalorder %s17, 0
      %s112 = scalar_select %p111, %s17, 0
      %s113 = sadd.s32 %s112, %s110
      %s114 = smul.addr %s113, 4
      %s115 = scalar_lea.vmem %s0, %s114
      %p116 = pneg %p47
      %p117 = pneg %p44
      %p118 = pneg %p73
      %p119 = pneg %p70
      %p120 = scmp.lt.s32.totalorder %s16, 1
      %s121 = scalar_select %p120, %s16, 1
      %s122 = smul.addr %s121, 8
      %s123 = scalar_lea.vmem %s1, %s122
      %p124 = scmp.lt.s32.totalorder %s16, 1
      %s125 = scalar_select %p124, %s16, 1
      %p126 = scmp.lt.s32.totalorder %s17, 0
      %s127 = scalar_select %p126, %s17, 0
      %s128 = sadd.s32 %s127, %s125
      %s129 = smul.addr %s128, 4
      %s130 = scalar_lea.vmem %s0, %s129
      %p131 = scmp.lt.s32.totalorder %s16, 1
      %s132 = scalar_select %p131, %s16, 1
      %s133 = smul.addr %s132, 8
      %s134 = scalar_lea.vmem %s1, %s133
      %p136 = scmp.eq.s32.totalorder %s17, 0
      // Predicated region
      $region25: #{factorized_forward.2} parent=23 // pred_check
        %p137 = pneg %p136
      $region26: #{factorized_forward.2} parent=23 // pred_check_branch
        %139 = sbr.rel (%p137) target = $region28
      $region27: #{factorized_forward.2} parent=23 // pred_region
        %vm140 = vcmask 72704
        %141 = vst.msk [vmem:[%s134] sm:$0xff] %vm140, 0.0
      $region28: #{factorized_forward.2} parent=23 // pred_fallthru
        _
      %v142 = vld [vmem:[%s130] sm:$0xf]
      %143 = vmatpush.bf16.xpose.msra.mxu0 0
      %144 = vmatpush.bf16.xpose.msra.mxu0 0
      %145 = vmatpush.bf16.xpose.msra.mxu0 0
      %146 = vmatpush.bf16.xpose.msra.mxu0 0
      %147 = vmatpush.bf16.xpose.msra.mxu0 0
      %148 = vmatpush.bf16.xpose.msra.mxu0 0
      %149 = vmatpush.bf16.xpose.msra.mxu0 0
      %150 = vmatpush.bf16.xpose.msra.mxu0 %v142
      %151 = vmatmul.bf16.gmra.mxu0 %v142
      %v152 = vpop.f32.mrf.mxu0
      %v153 = vadd.f32 0.0, %v152
      %v154 = vpop.f32.mrf.mxu0
      %155 = vdwg.mxu0
      %v156 = vunpack.c.l.bf16 %v142
      %157 = vadd.xlane.f32.xlu0 %v156
      %v158 = vpop.xlane.xlu0 %157
      %v159 = vld [vmem:[%s134] sm:$0xff]
      %vm160 = vcmask 64512
      %v161 = vsel %vm160, %v153, %v158
      %v162 = vadd.f32 %v159, %v161
      %vm163 = vcmask 72704
      %164 = vst.msk [vmem:[%s134] sm:$0xff] %vm163, %v162
      %p165 = scmp.lt.s32.totalorder %s16, 1
      %s166 = scalar_select %p165, %s16, 1
      %s167 = smul.addr %s166, 8
      %s168 = scalar_lea.vmem %s1, %s167
      // Predicated region
      $region29: #{factorized_forward.2} parent=23 // pred_check
        %p169 = pneg %p70
      $region30: #{factorized_forward.2} parent=23 // pred_check_branch
        %171 = sbr.rel (%p169) target = $region32
      $region31: #{factorized_forward.2} parent=23 // pred_region
        _
      $region32: #{factorized_forward.2} parent=23 // pred_fallthru
        _
    $region24: #{factorized_forward.2} parent=5 // pred_fallthru
      _
    %p172 = scmp.le.s32.totalorder 2, %s7
    // Predicated region
    $region33: #{factorized_forward.2} parent=5 // pred_check
      %p173 = pneg %p172
    $region34: #{factorized_forward.2} parent=5 // pred_check_branch
      %175 = sbr.rel (%p173) target = $region36
    $region35: #{factorized_forward.2} parent=5 // pred_region
      %s176 = ssub.s32 %s7, 2
      // Predicated region
      $region37: #{factorized_forward.2} parent=35 // pred_check
        %p177 = pneg %p76
      $region38: #{factorized_forward.2} parent=35 // pred_check_branch
        %179 = sbr.rel (%p177) target = $region40
      $region39: #{factorized_forward.2} parent=35 // pred_region
        %p180 = scmp.lt.s32.totalorder %s18, 1
        %s181 = scalar_select %p180, %s18, 1
        %s182 = smul.addr %s181, 8
        %s183 = scalar_lea.vmem %s1, %s182
      $region40: #{factorized_forward.2} parent=35 // pred_fallthru
        _
    $region36: #{factorized_forward.2} parent=5 // pred_fallthru
      _
  $region6: #{factorized_forward.2} parent=0 // loop_footer
    %s11 = sadd.s32 1, %s7
  $region7: #{factorized_forward.2} parent=0 // loop_footer_branch
    %6 = sbr.rel target = $region3
  $region8: #{factorized_forward.2} parent=0 // loop_exit
    _

// kernel: factorized_forward.3
$region0: #{factorized_forward.3}
  #allocation0 [shape = 'u32[]', space=smem, size = 0x4, offset = 0x4, fixed_abs, tag = 'smem constant byte address 0x4 - core index']
  #allocation1 [shape = 'u32[72,128]{1,0:T(1,128)}', space=vmem, size = 0x9000, scoped, tag = 'internal scratch']
  %s0 = inlined_call_operand.vmem [shape: bf16[2,8,128], index: 0, kind: input, shape index: {}]
  %s1 = inlined_call_operand.vmem [shape: bf16[8,8], index: 1, kind: input, shape index: {}]
  %s2 = inlined_call_operand.vmem [shape: f32[8,1], index: 2, kind: input, shape index: {}]
  %s3 = inlined_call_operand.vmem [shape: f32[2,8,128], index: 3, kind: output, shape index: {}]
  %s4 = sld [smem:[#allocation0]]
  $region45: #{factorized_forward.3} parent=0
    _
  %s6 = ssub.s32 1, %s4
  %s7 = scalar_select 0, %s6, %s4
  loop: start=0, step=1, limit=4
  $region2: #{factorized_forward.3} parent=0 // loop_pre_header
    _
  $region3: #{factorized_forward.3} parent=0 // loop_header
    %s9 = sphi 0, %s13
    %p10 = scmp.ge.s32.totalorder %s9, 4
    %s16 = sphi 0, %s28
    %s17 = sphi 0, %s24
    %s18 = sphi 0, %s16
    %s19 = sphi 0, %s17
    %s20 = sphi 0, %s18
    %s21 = sphi 0, %s19
    %s33 = sphi 0, %s35
    %s36 = sphi 0, %s33
    %s37 = sphi 0, %s36
    %s53 = sphi 0, %s37
    %s57 = sphi 0, %s57
    %s59 = sphi 0, %s57
    %s60 = sphi 0, %s59
    %s74 = sphi 0, %s60
    %s78 = sphi 0, %s78
    %s80 = sphi 0, %s78
    %s81 = sphi 0, %s80
    %s95 = sphi 0, %s81
    %s103 = sphi 0, %s105
    %s106 = sphi 0, %s103
    %s107 = sphi 0, %s106
    %s123 = sphi 0, %s107
  $region4: #{factorized_forward.3} parent=0 // loop_header_branch
    %12 = sbr.rel (%p10) target = $region8
  $region5: #{factorized_forward.3} parent=0 // loop_body
    %s14 = ssub.s32 %s9, 1
    %s15 = ssub.s32 %s9, 2
    %s22 = sadd.s32 1, %s17
    %p23 = scmp.ge.s32.totalorder %s22, 1
    %s24 = scalar_select %p23, 0, %s22
    %s25 = sadd.s32 1, %s16
    %s26 = scalar_select %p23, %s25, %s16
    %p27 = scmp.ge.s32.totalorder %s26, 2
    %s28 = scalar_select %p27, 0, %s26
    %s29 = ssub.s32 %s16, %s28
    %s30 = ssub.s32 %s17, %s24
    %s31 = sor.u32 %s29, %s30
    %p32 = scmp.eq.s32.totalorder %s31, 0
    %s34 = sadd.s32 %s33, 1
    %s35 = scalar_select %p32, %s33, %s34
    %p38 = pneg %p32
    %p39 = scmp.eq.s32.totalorder %s9, 1
    %p40 = por %p38, %p39
    %p41 = scmp.ne.s32.totalorder %s33, %s36
    %p42 = scmp.eq.s32.totalorder %s9, 0
    %p43 = por %p41, %p42
    %p44 = scmp.ne.s32.totalorder %s33, %s36
    %p45 = scmp.eq.s32.totalorder %s14, 1
    %p46 = por %p44, %p45
    %p47 = scmp.ne.s32.totalorder %s36, %s37
    %p48 = scmp.eq.s32.totalorder %s14, 0
    %p49 = por %p47, %p48
    %p50 = scmp.ne.s32.totalorder %s36, %s37
    %p51 = scmp.eq.s32.totalorder %s15, 1
    %p52 = por %p50, %p51
    %p54 = scmp.ne.s32.totalorder %s37, %s53
    %p55 = scmp.eq.s32.totalorder %s15, 0
    %p56 = por %p54, %p55
    %s58 = sadd.s32 %s57, 1
    %p61 = scmp.eq.s32.totalorder %s9, 1
    %p62 = scmp.ne.s32.totalorder %s57, %s59
    %p63 = scmp.eq.s32.totalorder %s9, 0
    %p64 = por %p62, %p63
    %p65 = scmp.ne.s32.totalorder %s57, %s59
    %p66 = scmp.eq.s32.totalorder %s14, 1
    %p67 = por %p65, %p66
    %p68 = scmp.ne.s32.totalorder %s59, %s60
    %p69 = scmp.eq.s32.totalorder %s14, 0
    %p70 = por %p68, %p69
    %p71 = scmp.ne.s32.totalorder %s59, %s60
    %p72 = scmp.eq.s32.totalorder %s15, 1
    %p73 = por %p71, %p72
    %p75 = scmp.ne.s32.totalorder %s60, %s74
    %p76 = scmp.eq.s32.totalorder %s15, 0
    %p77 = por %p75, %p76
    %s79 = sadd.s32 %s78, 1
    %p82 = scmp.eq.s32.totalorder %s9, 1
    %p83 = scmp.ne.s32.totalorder %s78, %s80
    %p84 = scmp.eq.s32.totalorder %s9, 0
    %p85 = por %p83, %p84
    %p86 = scmp.ne.s32.totalorder %s78, %s80
    %p87 = scmp.eq.s32.totalorder %s14, 1
    %p88 = por %p86, %p87
    %p89 = scmp.ne.s32.totalorder %s80, %s81
    %p90 = scmp.eq.s32.totalorder %s14, 0
    %p91 = por %p89, %p90
    %p92 = scmp.ne.s32.totalorder %s80, %s81
    %p93 = scmp.eq.s32.totalorder %s15, 1
    %p94 = por %p92, %p93
    %p96 = scmp.ne.s32.totalorder %s81, %s95
    %p97 = scmp.eq.s32.totalorder %s15, 0
    %p98 = por %p96, %p97
    %s99 = ssub.s32 %s16, %s28
    %s100 = ssub.s32 %s17, %s24
    %s101 = sor.u32 %s99, %s100
    %p102 = scmp.eq.s32.totalorder %s101, 0
    %s104 = sadd.s32 %s103, 1
    %s105 = scalar_select %p102, %s103, %s104
    %p108 = pneg %p102
    %p109 = scmp.eq.s32.totalorder %s9, 1
    %p110 = por %p108, %p109
    %p111 = scmp.ne.s32.totalorder %s103, %s106
    %p112 = scmp.eq.s32.totalorder %s9, 0
    %p113 = por %p111, %p112
    %p114 = scmp.ne.s32.totalorder %s103, %s106
    %p115 = scmp.eq.s32.totalorder %s14, 1
    %p116 = por %p114, %p115
    %p117 = scmp.ne.s32.totalorder %s106, %s107
    %p118 = scmp.eq.s32.totalorder %s14, 0
    %p119 = por %p117, %p118
    %p120 = scmp.ne.s32.totalorder %s106, %s107
    %p121 = scmp.eq.s32.totalorder %s15, 1
    %p122 = por %p120, %p121
    %p124 = scmp.ne.s32.totalorder %s107, %s123
    %p125 = scmp.eq.s32.totalorder %s15, 0
    %p126 = por %p124, %p125
    %p127 = scmp.le.s32.totalorder 1, %s9
    %p128 = scmp.lt.s32.totalorder %s9, 3
    %p129 = pnand %p127, %p128
    %p130 = pneg %p129
    // Predicated region
    $region9: #{factorized_forward.3} parent=5 // pred_check
      _
    $region10: #{factorized_forward.3} parent=5 // pred_check_branch
      %132 = sbr.rel (%p129) target = $region12
    $region11: #{factorized_forward.3} parent=5 // pred_region
      %s133 = ssub.s32 %s9, 1
      // Predicated region
      $region13: #{factorized_forward.3} parent=11 // pred_check
        %p134 = pneg %p70
      $region14: #{factorized_forward.3} parent=11 // pred_check_branch
        %136 = sbr.rel (%p134) target = $region16
      $region15: #{factorized_forward.3} parent=11 // pred_region
        _
      $region16: #{factorized_forward.3} parent=11 // pred_fallthru
        _
      // Predicated region
      $region17: #{factorized_forward.3} parent=11 // pred_check
        %p137 = pneg %p91
      $region18: #{factorized_forward.3} parent=11 // pred_check_branch
        %139 = sbr.rel (%p137) target = $region20
      $region19: #{factorized_forward.3} parent=11 // pred_region
        _
      $region20: #{factorized_forward.3} parent=11 // pred_fallthru
        _
    $region12: #{factorized_forward.3} parent=5 // pred_fallthru
      _
    %p140 = scmp.lt.s32.totalorder %s9, 2
    // Predicated region
    $region21: #{factorized_forward.3} parent=5 // pred_check
      %p141 = pneg %p140
    $region22: #{factorized_forward.3} parent=5 // pred_check_branch
      %143 = sbr.rel (%p141) target = $region24
    $region23: #{factorized_forward.3} parent=5 // pred_region
      // Predicated region
      $region25: #{factorized_forward.3} parent=23 // pred_check
        %p144 = pneg %p43
      $region26: #{factorized_forward.3} parent=23 // pred_check_branch
        %146 = sbr.rel (%p144) target = $region28
      $region27: #{factorized_forward.3} parent=23 // pred_region
        %p147 = scmp.lt.s32.totalorder %s16, 1
        %s148 = scalar_select %p147, %s16, 1
        %p149 = scmp.lt.s32.totalorder %s17, 0
        %s150 = scalar_select %p149, %s17, 0
        %s151 = sadd.s32 %s150, %s148
        %s152 = smul.addr %s151, 4
        %s153 = scalar_lea.vmem %s0, %s152
      $region28: #{factorized_forward.3} parent=23 // pred_fallthru
        _
    $region24: #{factorized_forward.3} parent=5 // pred_fallthru
      _
    %p154 = scmp.le.s32.totalorder 1, %s9
    %p155 = scmp.lt.s32.totalorder %s9, 3
    %p156 = pnand %p154, %p155
    %p157 = pneg %p156
    // Predicated region
    $region29: #{factorized_forward.3} parent=5 // pred_check
      _
    $region30: #{factorized_forward.3} parent=5 // pred_check_branch
      %159 = sbr.rel (%p156) target = $region32
    $region31: #{factorized_forward.3} parent=5 // pred_region
      %s160 = ssub.s32 %s9, 1
      %p161 = scmp.lt.s32.totalorder %s18, 1
      %s162 = scalar_select %p161, %s18, 1
      %p163 = scmp.lt.s32.totalorder %s19, 0
      %s164 = scalar_select %p163, %s19, 0
      %s165 = sadd.s32 %s164, %s162
      %s166 = smul.addr %s165, 4
      %s167 = scalar_lea.vmem %s0, %s166
      %p168 = pneg %p49
      %p169 = pneg %p46
      %p170 = pneg %p70
      %p171 = pneg %p67
      %p172 = pneg %p91
      %p173 = pneg %p88
      %p174 = pneg %p119
      %p175 = pneg %p116
      %p176 = scmp.lt.s32.totalorder %s18, 1
      %s177 = scalar_select %p176, %s18, 1
      %p178 = scmp.lt.s32.totalorder %s19, 0
      %s179 = scalar_select %p178, %s19, 0
      %s180 = sadd.s32 %s179, %s177
      %s181 = smul.addr %s180, 8
      %s182 = scalar_lea.vmem %s3, %s181
      %p183 = scmp.lt.s32.totalorder %s18, 1
      %s184 = scalar_select %p183, %s18, 1
      %p185 = scmp.lt.s32.totalorder %s19, 0
      %s186 = scalar_select %p185, %s19, 0
      %s187 = sadd.s32 %s186, %s184
      %s188 = smul.addr %s187, 4
      %s189 = scalar_lea.vmem %s0, %s188
      %p190 = scmp.lt.s32.totalorder %s18, 1
      %s191 = scalar_select %p190, %s18, 1
      %p192 = scmp.lt.s32.totalorder %s19, 0
      %s193 = scalar_select %p192, %s19, 0
      %s194 = sadd.s32 %s193, %s191
      %s195 = smul.addr %s194, 8
      %s196 = scalar_lea.vmem %s3, %s195
      %v198 = vld [vmem:[%s1] sm:$0xf]
      %v199 = vld [vmem:[%s189] sm:$0xf]
      %v200 = vld [vmem:[%s2] sm:$0xff]
      %202 = vset.pattern.permute.xlu0 0
      %203 = vperm.xlu0 %202, %v200
      %v204 = vpop.permute.xlu0 %203
      %vm206 = vcmask 64512
      %v208 = vsel %vm206, %v198, 0
      %vm210 = vcmask 1043456
      %v212 = vsel %vm210, %v199, 0
      %214 = vmatpush.bf16.msra.mxu0 0
      %215 = vmatpush.bf16.msra.mxu0 0
      %216 = vmatpush.bf16.msra.mxu0 0
      %217 = vmatpush.bf16.msra.mxu0 0
      %218 = vmatpush.bf16.msra.mxu0 0
      %219 = vmatpush.bf16.msra.mxu0 0
      %220 = vmatpush.bf16.msra.mxu0 0
      %221 = vmatpush.bf16.msra.mxu0 %v212
      %222 = vmatmul.bf16.gmra.mxu0 %v208
      %v223 = vpop.f32.mrf.mxu0
      %v224 = vadd.f32 %v204, %v223
      %v225 = vpop.f32.mrf.mxu0
      %226 = vdwg.mxu0
      %227 = vst [vmem:[%s196] sm:$0xff] %v224
      %p228 = scmp.lt.s32.totalorder %s18, 1
      %s229 = scalar_select %p228, %s18, 1
      %p230 = scmp.lt.s32.totalorder %s19, 0
      %s231 = scalar_select %p230, %s19, 0
      %s232 = sadd.s32 %s231, %s229
      %s233 = smul.addr %s232, 8
      %s234 = scalar_lea.vmem %s3, %s233
      // Predicated region
      $region33: #{factorized_forward.3} parent=31 // pred_check
        %p235 = pneg %p116
      $region34: #{factorized_forward.3} parent=31 // pred_check_branch
        %237 = sbr.rel (%p235) target = $region36
      $region35: #{factorized_forward.3} parent=31 // pred_region
        _
      $region36: #{factorized_forward.3} parent=31 // pred_fallthru
        _
    $region32: #{factorized_forward.3} parent=5 // pred_fallthru
      _
    %p238 = scmp.le.s32.totalorder 2, %s9
    // Predicated region
    $region37: #{factorized_forward.3} parent=5 // pred_check
      %p239 = pneg %p238
    $region38: #{factorized_forward.3} parent=5 // pred_check_branch
      %241 = sbr.rel (%p239) target = $region40
    $region39: #{factorized_forward.3} parent=5 // pred_region
      %s242 = ssub.s32 %s9, 2
      // Predicated region
      $region41: #{factorized_forward.3} parent=39 // pred_check
        %p243 = pneg %p122
      $region42: #{factorized_forward.3} parent=39 // pred_check_branch
        %245 = sbr.rel (%p243) target = $region44
      $region43: #{factorized_forward.3} parent=39 // pred_region
        %p246 = scmp.lt.s32.totalorder %s20, 1
        %s247 = scalar_select %p246, %s20, 1
        %p248 = scmp.lt.s32.totalorder %s21, 0
        %s249 = scalar_select %p248, %s21, 0
        %s250 = sadd.s32 %s249, %s247
        %s251 = smul.addr %s250, 8
        %s252 = scalar_lea.vmem %s3, %s251
      $region44: #{factorized_forward.3} parent=39 // pred_fallthru
        _
    $region40: #{factorized_forward.3} parent=5 // pred_fallthru
      _
  $region6: #{factorized_forward.3} parent=0 // loop_footer
    %s13 = sadd.s32 1, %s9
  $region7: #{factorized_forward.3} parent=0 // loop_footer_branch
    %8 = sbr.rel target = $region3
  $region8: #{factorized_forward.3} parent=0 // loop_exit
    _

</llo_original>
